<compile_context>
chip_gen: v7x
topology: tpu7x:2x2x1
jax: 0.10.0
libtpu: 0.0.40
codegen_flags: <defaults>
</compile_context>

<pallas_src>
import jax
import jax.numpy as jnp
from jax import lax
from jax.experimental import pallas as pl
from jax.experimental.pallas import tpu as pltpu


def _round_up(x, m):
    return ((x + m - 1) // m) * m


def _mlp_kernel(x_ref, w0_ref, b0_ref, w1_ref, b1_ref, w2_ref, b2_ref, eye2_ref, o_ref):
    x = x_ref[...]                                            # [tile, 20] batch-major (HBM layout)

    # dense0 + relu, computed feature-major: h0 = W0 @ x^T + b0 -> [10, tile].
    # The relayout is folded into the matmul (contract on x's feature axis).
    h0 = lax.dot_general(w0_ref[...], x, (((1,), (1,)), ((), ())),
                         preferred_element_type=jnp.float32) + b0_ref[...]
    h0 = jnp.maximum(h0, 0.0)

    # dropout(p=0.5): identity in eval/inference mode.

    # dense1 + relu: [10, 10] @ [10, tile] -> [10, tile]
    h1 = jnp.dot(w1_ref[...], h0, preferred_element_type=jnp.float32) + b1_ref[...]
    h1 = jnp.maximum(h1, 0.0)

    # output layer: [2, 10] @ [10, tile] -> [2, tile]
    logits = jnp.dot(w2_ref[...], h1, preferred_element_type=jnp.float32) + b2_ref[...]

    # Binary softmax as a per-lane sigmoid (exact): softmax([a, b]) = [1 - s, s],
    # s = sigmoid(b - a).  Kept feature-major so exp/div touch lane-dense [1, tile] data.
    d = logits[1:2, :] - logits[0:1, :]                       # [1, tile]
    p1 = 1.0 / (1.0 + jnp.exp(-d))
    p0 = 1.0 - p1
    probs = jnp.concatenate([p0, p1], axis=0)                 # [2, tile] feature-major

    # Relayout [2, tile] -> batch-major [tile, 2] via a tiny contraction with I2
    # (probs^T @ I2); avoids a standalone transpose and keeps the store block shape.
    out = lax.dot_general(probs, eye2_ref[...], (((0,), (0,)), ((), ())),
                          preferred_element_type=jnp.float32)  # [tile, 2]
    o_ref[...] = out.astype(o_ref.dtype)


def mlp_forward(x, params, *, tile_b=8192):
    """x: [B, 20] float32 (batch-major, PyTorch layout). Returns [B, 2] softmax probs."""
    B, f_in = x.shape
    w0, b0 = params["w0"], params["b0"]
    w1, b1 = params["w1"], params["b1"]
    w2, b2 = params["w2"], params["b2"]
    eye2 = jnp.eye(2, dtype=jnp.float32)      # 16-byte constant operand for the output relayout

    LANE, SUB, MAX_TILE = 128, 8, 16384
    if B <= LANE:
        tile = _round_up(B, SUB)                                            # single small block
    else:
        tile = max(LANE, (min(tile_b, MAX_TILE, _round_up(B, LANE)) // LANE) * LANE)
        # v7x megacore: keep >= 2 grid steps so both TensorCores get work.
        tile = min(tile, _round_up(pl.cdiv(B, 2), LANE))
    grid = pl.cdiv(B, tile)

    # Constant index_map -> weight/bias/I2 blocks fetched once, VMEM-resident across the grid.
    const = lambda a: pl.BlockSpec(a.shape, lambda i: (0, 0))

    n_param = sum(int(a.size) for a in (w0, b0, w1, b1, w2, b2))
    cost = pl.CostEstimate(
        flops=2 * B * (f_in * 10 + 10 * 10 + 10 * 2 + 2 * 2),
        transcendentals=B,                                   # one exp per sample (sigmoid)
        bytes_accessed=4 * (B * (f_in + 2) + n_param),
    )

    return pl.pallas_call(
        _mlp_kernel,
        out_shape=jax.ShapeDtypeStruct((B, 2), jnp.float32),
        grid=(grid,),
        in_specs=[
            pl.BlockSpec((tile, f_in), lambda i: (i, 0)),    # x: batch-major tiles
            const(w0), const(b0), const(w1), const(b1), const(w2), const(b2), const(eye2),
        ],
        out_specs=pl.BlockSpec((tile, 2), lambda i: (i, 0)),
        compiler_params=pltpu.CompilerParams(
            dimension_semantics=("parallel",),               # megacore sharding on v7x
            vmem_limit_bytes=64 * 1024 * 1024,               # lane-padded big tiles > v5e default
        ),
        cost_estimate=cost,
    )(x, w0, b0, w1, b1, w2, b2, eye2)


def init_params(key, num_units=10):
    """PyTorch nn.Linear default init: U(-1/sqrt(fan_in), 1/sqrt(fan_in)); W is [out, in]."""
    def linear(k, fan_in, fan_out):
        kw, kb = jax.random.split(k)
        bound = 1.0 / jnp.sqrt(float(fan_in))
        w = jax.random.uniform(kw, (fan_out, fan_in), jnp.float32, -bound, bound)
        b = jax.random.uniform(kb, (fan_out, 1), jnp.float32, -bound, bound)
        return w, b

    k0, k1, k2 = jax.random.split(key, 3)
    w0, b0 = linear(k0, 20, num_units)
    w1, b1 = linear(k1, num_units, 10)
    w2, b2 = linear(k2, 10, 2)
    return {"w0": w0, "b0": b0, "w1": w1, "b1": b1, "w2": w2, "b2": b2}


def _reference(x, p):
    h0 = jnp.maximum(x @ p["w0"].T + p["b0"].T, 0.0)
    h1 = jnp.maximum(h0 @ p["w1"].T + p["b1"].T, 0.0)
    logits = h1 @ p["w2"].T + p["b2"].T
    return jax.nn.softmax(logits, axis=-1)


if __name__ == "__main__":
    key = jax.random.PRNGKey(0)
    k_x, k_x2, k_p = jax.random.split(key, 3)
    params = init_params(k_p, num_units=10)

    # Small batch: single sublane-sized block, grid of 1.
    B = 8
    x = jax.random.normal(k_x, (B, 20), dtype=jnp.float32)
    out = jax.block_until_ready(mlp_forward(x, params))
    ref = _reference(x, params)
    assert out.shape == (B, 2)
    assert jnp.allclose(out, ref, atol=1e-5, rtol=1e-5)
    assert jnp.allclose(jnp.sum(out, axis=-1), jnp.ones((B,)), atol=1e-5)

    # Non-divisible batch: multi-step "parallel" grid + masked boundary block,
    # no wrapper pad/slice anywhere.
    B2 = 300
    x2 = jax.random.normal(k_x2, (B2, 20), dtype=jnp.float32)
    out2 = jax.block_until_ready(mlp_forward(x2, params))
    ref2 = _reference(x2, params)
    assert out2.shape == (B2, 2)
    assert jnp.allclose(out2, ref2, atol=1e-5, rtol=1e-5)
    assert jnp.allclose(jnp.sum(out2, axis=-1), jnp.ones((B2,)), atol=1e-5)

    print("KERNEL_OK")
</pallas_src>

<mosaic_0001>
module attributes {stable_mosaic.version = 11 : i64} {
  func.func @_mlp_kernel(%arg0: i32, %arg1: memref<8x20xf32, #tpu.memory_space<vmem>>, %arg2: memref<10x20xf32, #tpu.memory_space<vmem>>, %arg3: memref<10x1xf32, #tpu.memory_space<vmem>>, %arg4: memref<10x10xf32, #tpu.memory_space<vmem>>, %arg5: memref<10x1xf32, #tpu.memory_space<vmem>>, %arg6: memref<2x10xf32, #tpu.memory_space<vmem>>, %arg7: memref<2x1xf32, #tpu.memory_space<vmem>>, %arg8: memref<2x2xf32, #tpu.memory_space<vmem>>, %arg9: memref<8x2xf32, #tpu.memory_space<vmem>>) attributes {dimension_semantics = [#tpu.dimension_semantics<parallel>], iteration_bounds = array<i64: 1>, scalar_prefetch = 0 : i64, scratch_operands = 0 : i64, tpu.core_type = #tpu.core_type<tc>, window_params = [{transform_indices = @transform_0, window_bounds = array<i64: 8, 20>}, {pipeline_mode = #tpu.pipeline_mode<synchronous>, transform_indices = @transform_1, window_bounds = array<i64: 10, 20>}, {pipeline_mode = #tpu.pipeline_mode<synchronous>, transform_indices = @transform_2, window_bounds = array<i64: 10, 1>}, {pipeline_mode = #tpu.pipeline_mode<synchronous>, transform_indices = @transform_3, window_bounds = array<i64: 10, 10>}, {pipeline_mode = #tpu.pipeline_mode<synchronous>, transform_indices = @transform_4, window_bounds = array<i64: 10, 1>}, {pipeline_mode = #tpu.pipeline_mode<synchronous>, transform_indices = @transform_5, window_bounds = array<i64: 2, 10>}, {pipeline_mode = #tpu.pipeline_mode<synchronous>, transform_indices = @transform_6, window_bounds = array<i64: 2, 1>}, {pipeline_mode = #tpu.pipeline_mode<synchronous>, transform_indices = @transform_7, window_bounds = array<i64: 2, 2>}, {transform_indices = @transform_8, window_bounds = array<i64: 8, 2>}]} {
    %c0 = arith.constant 0 : index
    %c0_0 = arith.constant 0 : index
    %0 = vector.load %arg1[%c0, %c0_0] : memref<8x20xf32, #tpu.memory_space<vmem>>, vector<8x20xf32>
    %c0_1 = arith.constant 0 : index
    %c0_2 = arith.constant 0 : index
    %1 = vector.load %arg2[%c0_1, %c0_2] : memref<10x20xf32, #tpu.memory_space<vmem>>, vector<10x20xf32>
    %cst = arith.constant dense<0.000000e+00> : vector<10x8xf32>
    %2 = tpu.matmul %1, %0, %cst {dimension_numbers = #tpu.dot_dimension_numbers<[1], [1], [0], [0], [0, 0, 1, 0], [], []>} : vector<10x20xf32>, vector<8x20xf32>, vector<10x8xf32> -> vector<10x8xf32>
    %c0_3 = arith.constant 0 : index
    %c0_4 = arith.constant 0 : index
    %3 = vector.load %arg3[%c0_3, %c0_4] : memref<10x1xf32, #tpu.memory_space<vmem>>, vector<10x1xf32>
    %4 = vector.broadcast %3 : vector<10x1xf32> to vector<10x8xf32>
    %5 = arith.addf %2, %4 : vector<10x8xf32>
    %cst_5 = arith.constant 0.000000e+00 : f32
    %6 = vector.broadcast %cst_5 : f32 to vector<10x8xf32>
    %7 = arith.maximumf %5, %6 : vector<10x8xf32>
    %c0_6 = arith.constant 0 : index
    %c0_7 = arith.constant 0 : index
    %8 = vector.load %arg4[%c0_6, %c0_7] : memref<10x10xf32, #tpu.memory_space<vmem>>, vector<10x10xf32>
    %cst_8 = arith.constant dense<0.000000e+00> : vector<10x8xf32>
    %9 = tpu.matmul %8, %7, %cst_8 {dimension_numbers = #tpu.dot_dimension_numbers<[1], [0], [0], [1], [0, 0, 1, 1], [], []>} : vector<10x10xf32>, vector<10x8xf32>, vector<10x8xf32> -> vector<10x8xf32>
    %c0_9 = arith.constant 0 : index
    %c0_10 = arith.constant 0 : index
    %10 = vector.load %arg5[%c0_9, %c0_10] : memref<10x1xf32, #tpu.memory_space<vmem>>, vector<10x1xf32>
    %11 = vector.broadcast %10 : vector<10x1xf32> to vector<10x8xf32>
    %12 = arith.addf %9, %11 : vector<10x8xf32>
    %cst_11 = arith.constant 0.000000e+00 : f32
    %13 = vector.broadcast %cst_11 : f32 to vector<10x8xf32>
    %14 = arith.maximumf %12, %13 : vector<10x8xf32>
    %c0_12 = arith.constant 0 : index
    %c0_13 = arith.constant 0 : index
    %15 = vector.load %arg6[%c0_12, %c0_13] : memref<2x10xf32, #tpu.memory_space<vmem>>, vector<2x10xf32>
    %cst_14 = arith.constant dense<0.000000e+00> : vector<2x8xf32>
    %16 = tpu.matmul %15, %14, %cst_14 {dimension_numbers = #tpu.dot_dimension_numbers<[1], [0], [0], [1], [0, 0, 1, 1], [], []>} : vector<2x10xf32>, vector<10x8xf32>, vector<2x8xf32> -> vector<2x8xf32>
    %c0_15 = arith.constant 0 : index
    %c0_16 = arith.constant 0 : index
    %17 = vector.load %arg7[%c0_15, %c0_16] : memref<2x1xf32, #tpu.memory_space<vmem>>, vector<2x1xf32>
    %18 = vector.broadcast %17 : vector<2x1xf32> to vector<2x8xf32>
    %19 = arith.addf %16, %18 : vector<2x8xf32>
    %20 = vector.extract_strided_slice %19 {offsets = [1, 0], sizes = [1, 8], strides = [1, 1]} : vector<2x8xf32> to vector<1x8xf32>
    %21 = vector.extract_strided_slice %19 {offsets = [0, 0], sizes = [1, 8], strides = [1, 1]} : vector<2x8xf32> to vector<1x8xf32>
    %22 = arith.subf %20, %21 : vector<1x8xf32>
    %cst_17 = arith.constant 0.000000e+00 : f32
    %23 = vector.broadcast %cst_17 : f32 to vector<1x8xf32>
    %24 = arith.subf %23, %22 : vector<1x8xf32>
    %25 = math.exp %24 : vector<1x8xf32>
    %cst_18 = arith.constant 1.000000e+00 : f32
    %26 = vector.broadcast %cst_18 : f32 to vector<1x8xf32>
    %27 = arith.addf %26, %25 : vector<1x8xf32>
    %cst_19 = arith.constant 1.000000e+00 : f32
    %28 = vector.broadcast %cst_19 : f32 to vector<1x8xf32>
    %29 = arith.divf %28, %27 : vector<1x8xf32>
    %cst_20 = arith.constant 1.000000e+00 : f32
    %30 = vector.broadcast %cst_20 : f32 to vector<1x8xf32>
    %31 = arith.subf %30, %29 : vector<1x8xf32>
    %32 = tpu.concatenate %31, %29 in 0 : vector<1x8xf32>, vector<1x8xf32> -> vector<2x8xf32>
    %c0_21 = arith.constant 0 : index
    %c0_22 = arith.constant 0 : index
    %33 = vector.load %arg8[%c0_21, %c0_22] : memref<2x2xf32, #tpu.memory_space<vmem>>, vector<2x2xf32>
    %cst_23 = arith.constant dense<0.000000e+00> : vector<8x2xf32>
    %34 = tpu.matmul %32, %33, %cst_23 {dimension_numbers = #tpu.dot_dimension_numbers<[0], [0], [1], [1], [0, 1, 1, 1], [], []>} : vector<2x8xf32>, vector<2x2xf32>, vector<8x2xf32> -> vector<8x2xf32>
    %c0_24 = arith.constant 0 : index
    %c0_25 = arith.constant 0 : index
    %35 = vector.load %arg9[%c0_24, %c0_25] : memref<8x2xf32, #tpu.memory_space<vmem>>, vector<8x2xf32>
    tpu.vector_store %arg9[%c0_24, %c0_25], %34 {strides = array<i32>} : memref<8x2xf32, #tpu.memory_space<vmem>>, vector<8x2xf32>,
    return
  }
  func.func @transform_0(%arg0: i32) -> (i32, i32) {
    %c0_i32 = arith.constant 0 : i32
    %c0_i32_0 = arith.constant 0 : i32
    return %arg0, %c0_i32 : i32, i32
  }
  func.func @transform_1(%arg0: i32) -> (i32, i32) {
    %c0_i32 = arith.constant 0 : i32
    %c0_i32_0 = arith.constant 0 : i32
    %c0_i32_1 = arith.constant 0 : i32
    return %c0_i32, %c0_i32_0 : i32, i32
  }
  func.func @transform_2(%arg0: i32) -> (i32, i32) {
    %c0_i32 = arith.constant 0 : i32
    %c0_i32_0 = arith.constant 0 : i32
    %c0_i32_1 = arith.constant 0 : i32
    return %c0_i32, %c0_i32_0 : i32, i32
  }
  func.func @transform_3(%arg0: i32) -> (i32, i32) {
    %c0_i32 = arith.constant 0 : i32
    %c0_i32_0 = arith.constant 0 : i32
    %c0_i32_1 = arith.constant 0 : i32
    return %c0_i32, %c0_i32_0 : i32, i32
  }
  func.func @transform_4(%arg0: i32) -> (i32, i32) {
    %c0_i32 = arith.constant 0 : i32
    %c0_i32_0 = arith.constant 0 : i32
    %c0_i32_1 = arith.constant 0 : i32
    return %c0_i32, %c0_i32_0 : i32, i32
  }
  func.func @transform_5(%arg0: i32) -> (i32, i32) {
    %c0_i32 = arith.constant 0 : i32
    %c0_i32_0 = arith.constant 0 : i32
    %c0_i32_1 = arith.constant 0 : i32
    return %c0_i32, %c0_i32_0 : i32, i32
  }
  func.func @transform_6(%arg0: i32) -> (i32, i32) {
    %c0_i32 = arith.constant 0 : i32
    %c0_i32_0 = arith.constant 0 : i32
    %c0_i32_1 = arith.constant 0 : i32
    return %c0_i32, %c0_i32_0 : i32, i32
  }
  func.func @transform_7(%arg0: i32) -> (i32, i32) {
    %c0_i32 = arith.constant 0 : i32
    %c0_i32_0 = arith.constant 0 : i32
    %c0_i32_1 = arith.constant 0 : i32
    return %c0_i32, %c0_i32_0 : i32, i32
  }
  func.func @transform_8(%arg0: i32) -> (i32, i32) {
    %c0_i32 = arith.constant 0 : i32
    %c0_i32_0 = arith.constant 0 : i32
    return %arg0, %c0_i32 : i32, i32
  }
}

</mosaic_0001>

<llo_original>
// kernel: tpu_custom_call.1
$region0: #{tpu_custom_call.1}
  #allocation0 [shape = 'u32[]', space=smem, size = 0x4, offset = 0x4, fixed_abs, tag = 'smem constant byte address 0x4 - core index']
  #allocation1 [shape = 'u32[144,128]{1,0:T(1,128)}', space=vmem, size = 0x12000, scoped, tag = 'internal scratch']
  %s0 = inlined_call_operand.hbm [shape: f32[8,20], index: 0, kind: input, shape index: {}]
  %s1 = inlined_call_operand.hbm [shape: f32[10,20], index: 1, kind: input, shape index: {}]
  %s2 = inlined_call_operand.hbm [shape: f32[10,1], index: 2, kind: input, shape index: {}]
  %s3 = inlined_call_operand.hbm [shape: f32[10,10], index: 3, kind: input, shape index: {}]
  %s4 = inlined_call_operand.hbm [shape: f32[10,1], index: 4, kind: input, shape index: {}]
  %s5 = inlined_call_operand.hbm [shape: f32[2,10], index: 5, kind: input, shape index: {}]
  %s6 = inlined_call_operand.hbm [shape: f32[2,1], index: 6, kind: input, shape index: {}]
  %s7 = inlined_call_operand.hbm [shape: f32[2,2], index: 7, kind: input, shape index: {}]
  %s8 = inlined_call_operand.hbm [shape: f32[8,2], index: 8, kind: output, shape index: {}]
  %s9 = sld [smem:[#allocation0]]
  $region74: #{tpu_custom_call.1} parent=0
    _
  %s11 = ssub.s32 1, %s9
  %s12 = scalar_select 0, %s11, %s9
  $region1: #{tpu_custom_call.1} parent=0
    #allocation2 [shape = 'u8[4096]{0}', space=vmem, size = 0x1000, scoped, tag = 'input window, operand 0, single buffered']
    #allocation3 [shape = 's32[1]{0}', space=sflag, size = 0x4, scoped, tag = 'scoped memory for tpu_custom_call.1']
    #allocation4 [shape = 's32[1]{0}', space=sflag, size = 0x4, scoped, tag = 'scoped memory for tpu_custom_call.1']
    #allocation5 [shape = 'u8[8192]{0}', space=vmem, size = 0x2000, scoped, tag = 'input window, operand 1, single buffered']
    #allocation6 [shape = 's32[1]{0}', space=sflag, size = 0x4, scoped, tag = 'scoped memory for tpu_custom_call.1']
    #allocation7 [shape = 'u8[8192]{0}', space=vmem, size = 0x2000, scoped, tag = 'input window, operand 2, single buffered']
    #allocation8 [shape = 'u8[8192]{0}', space=vmem, size = 0x2000, scoped, tag = 'input window, operand 3, single buffered']
    #allocation9 [shape = 's32[1]{0}', space=sflag, size = 0x4, scoped, tag = 'scoped memory for tpu_custom_call.1']
    #allocation10 [shape = 'u8[8192]{0}', space=vmem, size = 0x2000, scoped, tag = 'input window, operand 4, single buffered']
    #allocation11 [shape = 'u8[1024]{0}', space=vmem, size = 0x400, scoped, tag = 'input window, operand 5, single buffered']
    #allocation12 [shape = 's32[1]{0}', space=sflag, size = 0x4, scoped, tag = 'scoped memory for tpu_custom_call.1']
    #allocation13 [shape = 'u8[1024]{0}', space=vmem, size = 0x400, scoped, tag = 'input window, operand 6, single buffered']
    #allocation14 [shape = 'u8[1024]{0}', space=vmem, size = 0x400, scoped, tag = 'input window, operand 7, single buffered']
    #allocation15 [shape = 's32[1]{0}', space=sflag, size = 0x4, scoped, tag = 'scoped memory for tpu_custom_call.1']
    #allocation16 [shape = 'u8[4096]{0}', space=vmem, size = 0x1000, scoped, tag = 'output window, operand 0, single buffered']
    %13 = vsyncpa [#allocation3], 0
    %14 = vsyncpa [#allocation6], 0
    %15 = vsyncpa [#allocation9], 0
    %16 = vsyncpa [#allocation12], 0
    %17 = vsyncpa [#allocation15], 0
    %18 = vsyncpa [#allocation4], 0
    // Predicated region
    $region2: #{tpu_custom_call.1} parent=1 // pred_check
      _
    $region3: #{tpu_custom_call.1} parent=1 // pred_check_branch
      %20 = sbr.rel (0) target = $region5
    $region4: #{tpu_custom_call.1} parent=1 // pred_region
      %s22 = ssub.s32 128, 128
      %23 = vsyncadd [#allocation3], %s22
      %s25 = sshll.u32 [#allocation2], 4
      %s26 = int_to_ptr.vmem [resolvable:$true] %s25
      %28 = dma.hbm_to_vmem [thread:$0]  %s0, 128, %s26, [#allocation3]
    $region5: #{tpu_custom_call.1} parent=1 // pred_fallthru
      _
    // Predicated region
    $region6: #{tpu_custom_call.1} parent=1 // pred_check
      _
    $region7: #{tpu_custom_call.1} parent=1 // pred_check_branch
      %30 = sbr.rel (0) target = $region9
    $region8: #{tpu_custom_call.1} parent=1 // pred_region
      %s32 = ssub.s32 256, 256
      %33 = vsyncadd [#allocation6], %s32
      %s34 = sshll.u32 [#allocation5], 4
      %s35 = int_to_ptr.vmem [resolvable:$true] %s34
      %40 = dma.hbm_to_vmem [thread:$0]  %s1, 256, %s35, [#allocation6], 128, 128, 8
    $region9: #{tpu_custom_call.1} parent=1 // pred_fallthru
      _
    // Predicated region
    $region10: #{tpu_custom_call.1} parent=1 // pred_check
      _
    $region11: #{tpu_custom_call.1} parent=1 // pred_check_branch
      %42 = sbr.rel (0) target = $region13
    $region12: #{tpu_custom_call.1} parent=1 // pred_region
      %s44 = ssub.s32 256, 256
      %45 = vsyncadd [#allocation6], %s44
      %s46 = sshll.u32 [#allocation7], 4
      %s47 = int_to_ptr.vmem [resolvable:$true] %s46
      %52 = dma.hbm_to_vmem [thread:$0]  %s2, 256, %s47, [#allocation6], 128, 128, 8
    $region13: #{tpu_custom_call.1} parent=1 // pred_fallthru
      _
    // Predicated region
    $region14: #{tpu_custom_call.1} parent=1 // pred_check
      _
    $region15: #{tpu_custom_call.1} parent=1 // pred_check_branch
      %54 = sbr.rel (0) target = $region17
    $region16: #{tpu_custom_call.1} parent=1 // pred_region
      %s56 = ssub.s32 256, 256
      %57 = vsyncadd [#allocation9], %s56
      %s58 = sshll.u32 [#allocation8], 4
      %s59 = int_to_ptr.vmem [resolvable:$true] %s58
      %64 = dma.hbm_to_vmem [thread:$0]  %s3, 256, %s59, [#allocation9], 128, 128, 8
    $region17: #{tpu_custom_call.1} parent=1 // pred_fallthru
      _
    // Predicated region
    $region18: #{tpu_custom_call.1} parent=1 // pred_check
      _
    $region19: #{tpu_custom_call.1} parent=1 // pred_check_branch
      %66 = sbr.rel (0) target = $region21
    $region20: #{tpu_custom_call.1} parent=1 // pred_region
      %s68 = ssub.s32 256, 256
      %69 = vsyncadd [#allocation9], %s68
      %s70 = sshll.u32 [#allocation10], 4
      %s71 = int_to_ptr.vmem [resolvable:$true] %s70
      %76 = dma.hbm_to_vmem [thread:$0]  %s4, 256, %s71, [#allocation9], 128, 128, 8
    $region21: #{tpu_custom_call.1} parent=1 // pred_fallthru
      _
    // Predicated region
    $region22: #{tpu_custom_call.1} parent=1 // pred_check
      _
    $region23: #{tpu_custom_call.1} parent=1 // pred_check_branch
      %78 = sbr.rel (0) target = $region25
    $region24: #{tpu_custom_call.1} parent=1 // pred_region
      %s80 = ssub.s32 32, 32
      %81 = vsyncadd [#allocation12], %s80
      %s83 = sshll.u32 [#allocation11], 4
      %s84 = int_to_ptr.vmem [resolvable:$true] %s83
      %86 = dma.hbm_to_vmem [thread:$0]  %s5, 32, %s84, [#allocation12]
    $region25: #{tpu_custom_call.1} parent=1 // pred_fallthru
      _
    // Predicated region
    $region26: #{tpu_custom_call.1} parent=1 // pred_check
      _
    $region27: #{tpu_custom_call.1} parent=1 // pred_check_branch
      %88 = sbr.rel (0) target = $region29
    $region28: #{tpu_custom_call.1} parent=1 // pred_region
      %s90 = ssub.s32 32, 32
      %91 = vsyncadd [#allocation12], %s90
      %s93 = sshll.u32 [#allocation13], 4
      %s94 = int_to_ptr.vmem [resolvable:$true] %s93
      %96 = dma.hbm_to_vmem [thread:$0]  %s6, 32, %s94, [#allocation12]
    $region29: #{tpu_custom_call.1} parent=1 // pred_fallthru
      _
    // Predicated region
    $region30: #{tpu_custom_call.1} parent=1 // pred_check
      _
    $region31: #{tpu_custom_call.1} parent=1 // pred_check_branch
      %98 = sbr.rel (0) target = $region33
    $region32: #{tpu_custom_call.1} parent=1 // pred_region
      %s100 = ssub.s32 32, 32
      %101 = vsyncadd [#allocation15], %s100
      %s103 = sshll.u32 [#allocation14], 4
      %s104 = int_to_ptr.vmem [resolvable:$true] %s103
      %106 = dma.hbm_to_vmem [thread:$0]  %s7, 32, %s104, [#allocation15]
    $region33: #{tpu_custom_call.1} parent=1 // pred_fallthru
      _
    // Predicated region
    $region34: #{tpu_custom_call.1} parent=1 // pred_check
      _
    $region35: #{tpu_custom_call.1} parent=1 // pred_check_branch
      %108 = sbr.rel (0) target = $region37
    $region36: #{tpu_custom_call.1} parent=1 // pred_region
      %109 = dma.done [#allocation3], 128
    $region37: #{tpu_custom_call.1} parent=1 // pred_fallthru
      _
    // Predicated region
    $region38: #{tpu_custom_call.1} parent=1 // pred_check
      _
    $region39: #{tpu_custom_call.1} parent=1 // pred_check_branch
      %111 = sbr.rel (0) target = $region41
    $region40: #{tpu_custom_call.1} parent=1 // pred_region
      %112 = dma.done [#allocation6], 256
    $region41: #{tpu_custom_call.1} parent=1 // pred_fallthru
      _
    // Predicated region
    $region42: #{tpu_custom_call.1} parent=1 // pred_check
      _
    $region43: #{tpu_custom_call.1} parent=1 // pred_check_branch
      %114 = sbr.rel (0) target = $region45
    $region44: #{tpu_custom_call.1} parent=1 // pred_region
      %115 = dma.done [#allocation6], 256
    $region45: #{tpu_custom_call.1} parent=1 // pred_fallthru
      _
    // Predicated region
    $region46: #{tpu_custom_call.1} parent=1 // pred_check
      _
    $region47: #{tpu_custom_call.1} parent=1 // pred_check_branch
      %117 = sbr.rel (0) target = $region49
    $region48: #{tpu_custom_call.1} parent=1 // pred_region
      %118 = dma.done [#allocation9], 256
    $region49: #{tpu_custom_call.1} parent=1 // pred_fallthru
      _
    // Predicated region
    $region50: #{tpu_custom_call.1} parent=1 // pred_check
      _
    $region51: #{tpu_custom_call.1} parent=1 // pred_check_branch
      %120 = sbr.rel (0) target = $region53
    $region52: #{tpu_custom_call.1} parent=1 // pred_region
      %121 = dma.done [#allocation9], 256
    $region53: #{tpu_custom_call.1} parent=1 // pred_fallthru
      _
    // Predicated region
    $region54: #{tpu_custom_call.1} parent=1 // pred_check
      _
    $region55: #{tpu_custom_call.1} parent=1 // pred_check_branch
      %123 = sbr.rel (0) target = $region57
    $region56: #{tpu_custom_call.1} parent=1 // pred_region
      %124 = dma.done [#allocation12], 32
    $region57: #{tpu_custom_call.1} parent=1 // pred_fallthru
      _
    // Predicated region
    $region58: #{tpu_custom_call.1} parent=1 // pred_check
      _
    $region59: #{tpu_custom_call.1} parent=1 // pred_check_branch
      %126 = sbr.rel (0) target = $region61
    $region60: #{tpu_custom_call.1} parent=1 // pred_region
      %127 = dma.done [#allocation12], 32
    $region61: #{tpu_custom_call.1} parent=1 // pred_fallthru
      _
    // Predicated region
    $region62: #{tpu_custom_call.1} parent=1 // pred_check
      _
    $region63: #{tpu_custom_call.1} parent=1 // pred_check_branch
      %129 = sbr.rel (0) target = $region65
    $region64: #{tpu_custom_call.1} parent=1 // pred_region
      %130 = dma.done [#allocation15], 32
    $region65: #{tpu_custom_call.1} parent=1 // pred_fallthru
      _
    %v131 = vld [vmem:[#allocation2] sm:$0xff]
    %v132 = vld [vmem:[#allocation5] sm:$0xff]
    %v133 = vld [vmem:[#allocation5 + $0x8] sm:$0x3]
    %v134 = vld [vmem:[#allocation7] sm:$0xff]
    %v135 = vld [vmem:[#allocation7 + $0x8] sm:$0x3]
    %137 = vset.pattern.permute.xlu0 0
    %138 = vperm.xlu0 %137, %v134
    %v139 = vpop.permute.xlu0 %138
    %142 = vset.pattern.permute.xlu0 0
    %143 = vperm.xlu0 %142, %v135
    %v144 = vpop.permute.xlu0 %143
    %vm146 = vcmask 162816
    %v148 = vsel %vm146, %v132, 0
    %v151 = vsel %vm146, %v133, 0
    %v154 = vsel %vm146, %v131, 0
    %156 = vmatprep.subr.mxu0 0.0
    %157 = vmatpush1.xpose.msra.mxu0 %v154
    %158 = vmatprep.subr.mxu0 0.0
    %159 = vmatpush1.xpose.msra.mxu0 0.0
    %160 = vmatprep.subr.mxu0 0.0
    %161 = vmatpush1.xpose.msra.mxu0 0.0
    %162 = vmatprep.subr.mxu0 0.0
    %163 = vmatpush1.xpose.msra.mxu0 0.0
    %164 = vmatprep.subr.mxu0 0.0
    %165 = vmatpush1.xpose.msra.mxu0 0.0
    %166 = vmatprep.subr.mxu0 0.0
    %167 = vmatpush1.xpose.msra.mxu0 0.0
    %168 = vmatprep.subr.mxu0 0.0
    %169 = vmatpush1.xpose.msra.mxu0 0.0
    %170 = vmatprep.subr.mxu0 0.0
    %171 = vmatpush1.xpose.msra.mxu0 0.0
    %172 = vmatprep.subr.mxu0 0.0
    %173 = vmatpush1.xpose.msra.mxu0 0.0
    %174 = vmatprep.subr.mxu0 0.0
    %175 = vmatpush1.xpose.msra.mxu0 0.0
    %176 = vmatprep.subr.mxu0 0.0
    %177 = vmatpush1.xpose.msra.mxu0 0.0
    %178 = vmatprep.subr.mxu0 0.0
    %179 = vmatpush1.xpose.msra.mxu0 0.0
    %180 = vmatprep.subr.mxu0 0.0
    %181 = vmatpush1.xpose.msra.mxu0 0.0
    %182 = vmatprep.subr.mxu0 0.0
    %183 = vmatpush1.xpose.msra.mxu0 0.0
    %184 = vmatprep.subr.mxu0 0.0
    %185 = vmatpush1.xpose.msra.mxu0 0.0
    %186 = vmatprep.subr.mxu0 0.0
    %187 = vmatpush1.xpose.msra.mxu0 0.0
    %188 = vmatprep.subr.mxu0 0.0
    %189 = vmatpush1.xpose.msra.mxu0 0.0
    %190 = vmatprep.subr.mxu0 0.0
    %191 = vmatpush1.xpose.msra.mxu0 0.0
    %192 = vmatprep.subr.mxu0 0.0
    %193 = vmatpush1.xpose.msra.mxu0 0.0
    %194 = vmatprep.subr.mxu0 0.0
    %195 = vmatpush1.xpose.msra.mxu0 0.0
    %196 = vmatprep.subr.mxu0 0.0
    %197 = vmatpush1.xpose.msra.mxu0 0.0
    %198 = vmatprep.subr.mxu0 0.0
    %199 = vmatpush1.xpose.msra.mxu0 0.0
    %200 = vmatprep.subr.mxu0 0.0
    %201 = vmatpush1.xpose.msra.mxu0 0.0
    %202 = vmatprep.subr.mxu0 0.0
    %203 = vmatpush1.xpose.msra.mxu0 0.0
    %204 = vmatprep.subr.mxu0 0.0
    %205 = vmatpush1.xpose.msra.mxu0 0.0
    %206 = vmatprep.subr.mxu0 0.0
    %207 = vmatpush1.xpose.msra.mxu0 0.0
    %208 = vmatprep.subr.mxu0 0.0
    %209 = vmatpush1.xpose.msra.mxu0 0.0
    %210 = vmatprep.subr.mxu0 0.0
    %211 = vmatpush1.xpose.msra.mxu0 0.0
    %212 = vmatprep.subr.mxu0 0.0
    %213 = vmatpush1.xpose.msra.mxu0 0.0
    %214 = vmatprep.subr.mxu0 0.0
    %215 = vmatpush1.xpose.msra.mxu0 0.0
    %216 = vmatprep.subr.mxu0 0.0
    %217 = vmatpush1.xpose.msra.mxu0 0.0
    %218 = vmatprep.subr.mxu0 0.0
    %219 = vmatpush1.xpose.msra.mxu0 0.0
    %220 = vmatprep.mubr.f32.mxu0 0.0
    %221 = vmatmul.mubr.f32.gmra.mrb[0].mxu0 %v148
    %v222 = vpop.f32.mrb[0].mxu0
    %v223 = vadd.f32 %v139, %v222
    %v224 = vpop.f32.mrb[0].mxu0
    %225 = vmatprep.mubr.f32.mxu0 0.0
    %226 = vmatmul.mubr.f32.gmra.mrb[0].mxu0 %v151
    %v227 = vpop.f32.mrb[0].mxu0
    %v228 = vadd.f32 %v144, %v227
    %v229 = vpop.f32.mrb[0].mxu0
    %230 = vdwg.mxu0
    %v231 = vmax.f32 %v223, 0.0
    %v232 = vmax.f32 %v228, 0.0
    %v233 = vld [vmem:[#allocation8] sm:$0xff]
    %v234 = vld [vmem:[#allocation8 + $0x8] sm:$0x3]
    %v235 = vld [vmem:[#allocation10] sm:$0xff]
    %v236 = vld [vmem:[#allocation10 + $0x8] sm:$0x3]
    %238 = vset.pattern.permute.xlu0 0
    %239 = vperm.xlu0 %238, %v235
    %v240 = vpop.permute.xlu0 %239
    %243 = vset.pattern.permute.xlu0 0
    %244 = vperm.xlu0 %243, %v236
    %v245 = vpop.permute.xlu0 %244
    %vm247 = vcmask 80896
    %v249 = vsel %vm247, %v233, 0
    %v252 = vsel %vm247, %v234, 0
    %vm254 = vcmask 1041408
    %v256 = vsel %vm254, %v232, 0
    %258 = vmatprep.subr.mxu0 0.0
    %259 = vmatpush1.msra.mxu0 %v231
    %260 = vmatprep.subr.mxu0 0.0
    %261 = vmatpush1.msra.mxu0 %v256
    %262 = vmatprep.subr.mxu0 0.0
    %263 = vmatpush1.msra.mxu0 0.0
    %264 = vmatprep.subr.mxu0 0.0
    %265 = vmatpush1.msra.mxu0 0.0
    %266 = vmatprep.subr.mxu0 0.0
    %267 = vmatpush1.msra.mxu0 0.0
    %268 = vmatprep.subr.mxu0 0.0
    %269 = vmatpush1.msra.mxu0 0.0
    %270 = vmatprep.subr.mxu0 0.0
    %271 = vmatpush1.msra.mxu0 0.0
    %272 = vmatprep.subr.mxu0 0.0
    %273 = vmatpush1.msra.mxu0 0.0
    %274 = vmatprep.subr.mxu0 0.0
    %275 = vmatpush1.msra.mxu0 0.0
    %276 = vmatprep.subr.mxu0 0.0
    %277 = vmatpush1.msra.mxu0 0.0
    %278 = vmatprep.subr.mxu0 0.0
    %279 = vmatpush1.msra.mxu0 0.0
    %280 = vmatprep.subr.mxu0 0.0
    %281 = vmatpush1.msra.mxu0 0.0
    %282 = vmatprep.subr.mxu0 0.0
    %283 = vmatpush1.msra.mxu0 0.0
    %284 = vmatprep.subr.mxu0 0.0
    %285 = vmatpush1.msra.mxu0 0.0
    %286 = vmatprep.subr.mxu0 0.0
    %287 = vmatpush1.msra.mxu0 0.0
    %288 = vmatprep.subr.mxu0 0.0
    %289 = vmatpush1.msra.mxu0 0.0
    %290 = vmatprep.subr.mxu0 0.0
    %291 = vmatpush1.msra.mxu0 0.0
    %292 = vmatprep.subr.mxu0 0.0
    %293 = vmatpush1.msra.mxu0 0.0
    %294 = vmatprep.subr.mxu0 0.0
    %295 = vmatpush1.msra.mxu0 0.0
    %296 = vmatprep.subr.mxu0 0.0
    %297 = vmatpush1.msra.mxu0 0.0
    %298 = vmatprep.subr.mxu0 0.0
    %299 = vmatpush1.msra.mxu0 0.0
    %300 = vmatprep.subr.mxu0 0.0
    %301 = vmatpush1.msra.mxu0 0.0
    %302 = vmatprep.subr.mxu0 0.0
    %303 = vmatpush1.msra.mxu0 0.0
    %304 = vmatprep.subr.mxu0 0.0
    %305 = vmatpush1.msra.mxu0 0.0
    %306 = vmatprep.subr.mxu0 0.0
    %307 = vmatpush1.msra.mxu0 0.0
    %308 = vmatprep.subr.mxu0 0.0
    %309 = vmatpush1.msra.mxu0 0.0
    %310 = vmatprep.subr.mxu0 0.0
    %311 = vmatpush1.msra.mxu0 0.0
    %312 = vmatprep.subr.mxu0 0.0
    %313 = vmatpush1.msra.mxu0 0.0
    %314 = vmatprep.subr.mxu0 0.0
    %315 = vmatpush1.msra.mxu0 0.0
    %316 = vmatprep.subr.mxu0 0.0
    %317 = vmatpush1.msra.mxu0 0.0
    %318 = vmatprep.subr.mxu0 0.0
    %319 = vmatpush1.msra.mxu0 0.0
    %320 = vmatprep.subr.mxu0 0.0
    %321 = vmatpush1.msra.mxu0 0.0
    %322 = vmatprep.mubr.f32.mxu0 0.0
    %323 = vmatmul.mubr.f32.gmra.mrb[0].mxu0 %v249
    %v324 = vpop.f32.mrb[0].mxu0
    %v325 = vadd.f32 %v240, %v324
    %v326 = vpop.f32.mrb[0].mxu0
    %327 = vmatprep.mubr.f32.mxu0 0.0
    %328 = vmatmul.mubr.f32.gmra.mrb[0].mxu0 %v252
    %v329 = vpop.f32.mrb[0].mxu0
    %v330 = vadd.f32 %v245, %v329
    %v331 = vpop.f32.mrb[0].mxu0
    %332 = vdwg.mxu0
    %v333 = vmax.f32 %v325, 0.0
    %v334 = vmax.f32 %v330, 0.0
    %v335 = vld [vmem:[#allocation11] sm:$0x3]
    %v336 = vld [vmem:[#allocation13] sm:$0x3]
    %338 = vset.pattern.permute.xlu0 0
    %339 = vperm.xlu0 %338, %v336
    %v340 = vpop.permute.xlu0 %339
    %v343 = vsel %vm247, %v335, 0
    %v346 = vsel %vm254, %v334, 0
    %348 = vmatprep.subr.mxu0 0.0
    %349 = vmatpush1.msra.mxu0 %v333
    %350 = vmatprep.subr.mxu0 0.0
    %351 = vmatpush1.msra.mxu0 %v346
    %352 = vmatprep.subr.mxu0 0.0
    %353 = vmatpush1.msra.mxu0 0.0
    %354 = vmatprep.subr.mxu0 0.0
    %355 = vmatpush1.msra.mxu0 0.0
    %356 = vmatprep.subr.mxu0 0.0
    %357 = vmatpush1.msra.mxu0 0.0
    %358 = vmatprep.subr.mxu0 0.0
    %359 = vmatpush1.msra.mxu0 0.0
    %360 = vmatprep.subr.mxu0 0.0
    %361 = vmatpush1.msra.mxu0 0.0
    %362 = vmatprep.subr.mxu0 0.0
    %363 = vmatpush1.msra.mxu0 0.0
    %364 = vmatprep.subr.mxu0 0.0
    %365 = vmatpush1.msra.mxu0 0.0
    %366 = vmatprep.subr.mxu0 0.0
    %367 = vmatpush1.msra.mxu0 0.0
    %368 = vmatprep.subr.mxu0 0.0
    %369 = vmatpush1.msra.mxu0 0.0
    %370 = vmatprep.subr.mxu0 0.0
    %371 = vmatpush1.msra.mxu0 0.0
    %372 = vmatprep.subr.mxu0 0.0
    %373 = vmatpush1.msra.mxu0 0.0
    %374 = vmatprep.subr.mxu0 0.0
    %375 = vmatpush1.msra.mxu0 0.0
    %376 = vmatprep.subr.mxu0 0.0
    %377 = vmatpush1.msra.mxu0 0.0
    %378 = vmatprep.subr.mxu0 0.0
    %379 = vmatpush1.msra.mxu0 0.0
    %380 = vmatprep.subr.mxu0 0.0
    %381 = vmatpush1.msra.mxu0 0.0
    %382 = vmatprep.subr.mxu0 0.0
    %383 = vmatpush1.msra.mxu0 0.0
    %384 = vmatprep.subr.mxu0 0.0
    %385 = vmatpush1.msra.mxu0 0.0
    %386 = vmatprep.subr.mxu0 0.0
    %387 = vmatpush1.msra.mxu0 0.0
    %388 = vmatprep.subr.mxu0 0.0
    %389 = vmatpush1.msra.mxu0 0.0
    %390 = vmatprep.subr.mxu0 0.0
    %391 = vmatpush1.msra.mxu0 0.0
    %392 = vmatprep.subr.mxu0 0.0
    %393 = vmatpush1.msra.mxu0 0.0
    %394 = vmatprep.subr.mxu0 0.0
    %395 = vmatpush1.msra.mxu0 0.0
    %396 = vmatprep.subr.mxu0 0.0
    %397 = vmatpush1.msra.mxu0 0.0
    %398 = vmatprep.subr.mxu0 0.0
    %399 = vmatpush1.msra.mxu0 0.0
    %400 = vmatprep.subr.mxu0 0.0
    %401 = vmatpush1.msra.mxu0 0.0
    %402 = vmatprep.subr.mxu0 0.0
    %403 = vmatpush1.msra.mxu0 0.0
    %404 = vmatprep.subr.mxu0 0.0
    %405 = vmatpush1.msra.mxu0 0.0
    %406 = vmatprep.subr.mxu0 0.0
    %407 = vmatpush1.msra.mxu0 0.0
    %408 = vmatprep.subr.mxu0 0.0
    %409 = vmatpush1.msra.mxu0 0.0
    %410 = vmatprep.subr.mxu0 0.0
    %411 = vmatpush1.msra.mxu0 0.0
    %412 = vmatprep.mubr.f32.mxu0 0.0
    %413 = vmatmul.mubr.f32.gmra.mrb[0].mxu0 %v343
    %v414 = vpop.f32.mrb[0].mxu0
    %v415 = vadd.f32 %v340, %v414
    %v416 = vpop.f32.mrb[0].mxu0
    %417 = vdwg.mxu0
    %v419 = vrot.slane %v415, 7
    %v421 = vsub.f32 %v415, %v419
    %v422 = vsub.f32 0.0, %v421
    %v423 = vmul.f32 %v422, 1.442695
    %v424 = vpow.pop %v423
    %v425 = vadd.f32 %v424, 1.0
    %v426 = vrcp.pop %v425
    %v427 = vmul.f32 1.0, %v426
    %v428 = vsub.f32 1.0, %v427
    %v430 = vrot.slane %v428, 1
    %vm432 = vcmask 1040384
    %v433 = vsel %vm432, %v430, %v427
    %v434 = vld [vmem:[#allocation14] sm:$0x3]
    %435 = vxpose.xlu0.b32.start [1/16] %v433, 128
    %436 = vxpose.xlu0.b32.cont [2/16] 0.0, 128
    %437 = vxpose.xlu0.b32.cont [3/16] 0.0, 128
    %438 = vxpose.xlu0.b32.cont [4/16] 0.0, 128
    %439 = vxpose.xlu0.b32.cont [5/16] 0.0, 128
    %440 = vxpose.xlu0.b32.cont [6/16] 0.0, 128
    %441 = vxpose.xlu0.b32.cont [7/16] 0.0, 128
    %442 = vxpose.xlu0.b32.cont [8/16] 0.0, 128
    %443 = vxpose.xlu0.b32.cont [9/16] 0.0, 128
    %444 = vxpose.xlu0.b32.cont [10/16] 0.0, 128
    %445 = vxpose.xlu0.b32.cont [11/16] 0.0, 128
    %446 = vxpose.xlu0.b32.cont [12/16] 0.0, 128
    %447 = vxpose.xlu0.b32.cont [13/16] 0.0, 128
    %448 = vxpose.xlu0.b32.cont [14/16] 0.0, 128
    %449 = vxpose.xlu0.b32.cont [15/16] 0.0, 128
    %450 = vxpose.xlu0.b32.end [16/16] 0.0, 128
    %v451 = vpop.trf.xlu0
    %v452 = vpop.trf.xlu0
    %v453 = vpop.trf.xlu0
    %v454 = vpop.trf.xlu0
    %v455 = vpop.trf.xlu0
    %v456 = vpop.trf.xlu0
    %v457 = vpop.trf.xlu0
    %v458 = vpop.trf.xlu0
    %v459 = vpop.trf.xlu0
    %v460 = vpop.trf.xlu0
    %v461 = vpop.trf.xlu0
    %v462 = vpop.trf.xlu0
    %v463 = vpop.trf.xlu0
    %v464 = vpop.trf.xlu0
    %v465 = vpop.trf.xlu0
    %v466 = vpop.trf.xlu0
    %vm467 = vcmask 15360
    %v469 = vsel %vm467, %v451, 0
    %v472 = vsel %vm254, %v434, 0
    %474 = vmatprep.subr.mxu0 0.0
    %475 = vmatpush1.msra.mxu0 %v472
    %476 = vmatprep.subr.mxu0 0.0
    %477 = vmatpush1.msra.mxu0 0.0
    %478 = vmatprep.subr.mxu0 0.0
    %479 = vmatpush1.msra.mxu0 0.0
    %480 = vmatprep.subr.mxu0 0.0
    %481 = vmatpush1.msra.mxu0 0.0
    %482 = vmatprep.subr.mxu0 0.0
    %483 = vmatpush1.msra.mxu0 0.0
    %484 = vmatprep.subr.mxu0 0.0
    %485 = vmatpush1.msra.mxu0 0.0
    %486 = vmatprep.subr.mxu0 0.0
    %487 = vmatpush1.msra.mxu0 0.0
    %488 = vmatprep.subr.mxu0 0.0
    %489 = vmatpush1.msra.mxu0 0.0
    %490 = vmatprep.subr.mxu0 0.0
    %491 = vmatpush1.msra.mxu0 0.0
    %492 = vmatprep.subr.mxu0 0.0
    %493 = vmatpush1.msra.mxu0 0.0
    %494 = vmatprep.subr.mxu0 0.0
    %495 = vmatpush1.msra.mxu0 0.0
    %496 = vmatprep.subr.mxu0 0.0
    %497 = vmatpush1.msra.mxu0 0.0
    %498 = vmatprep.subr.mxu0 0.0
    %499 = vmatpush1.msra.mxu0 0.0
    %500 = vmatprep.subr.mxu0 0.0
    %501 = vmatpush1.msra.mxu0 0.0
    %502 = vmatprep.subr.mxu0 0.0
    %503 = vmatpush1.msra.mxu0 0.0
    %504 = vmatprep.subr.mxu0 0.0
    %505 = vmatpush1.msra.mxu0 0.0
    %506 = vmatprep.subr.mxu0 0.0
    %507 = vmatpush1.msra.mxu0 0.0
    %508 = vmatprep.subr.mxu0 0.0
    %509 = vmatpush1.msra.mxu0 0.0
    %510 = vmatprep.subr.mxu0 0.0
    %511 = vmatpush1.msra.mxu0 0.0
    %512 = vmatprep.subr.mxu0 0.0
    %513 = vmatpush1.msra.mxu0 0.0
    %514 = vmatprep.subr.mxu0 0.0
    %515 = vmatpush1.msra.mxu0 0.0
    %516 = vmatprep.subr.mxu0 0.0
    %517 = vmatpush1.msra.mxu0 0.0
    %518 = vmatprep.subr.mxu0 0.0
    %519 = vmatpush1.msra.mxu0 0.0
    %520 = vmatprep.subr.mxu0 0.0
    %521 = vmatpush1.msra.mxu0 0.0
    %522 = vmatprep.subr.mxu0 0.0
    %523 = vmatpush1.msra.mxu0 0.0
    %524 = vmatprep.subr.mxu0 0.0
    %525 = vmatpush1.msra.mxu0 0.0
    %526 = vmatprep.subr.mxu0 0.0
    %527 = vmatpush1.msra.mxu0 0.0
    %528 = vmatprep.subr.mxu0 0.0
    %529 = vmatpush1.msra.mxu0 0.0
    %530 = vmatprep.subr.mxu0 0.0
    %531 = vmatpush1.msra.mxu0 0.0
    %532 = vmatprep.subr.mxu0 0.0
    %533 = vmatpush1.msra.mxu0 0.0
    %534 = vmatprep.subr.mxu0 0.0
    %535 = vmatpush1.msra.mxu0 0.0
    %536 = vmatprep.subr.mxu0 0.0
    %537 = vmatpush1.msra.mxu0 0.0
    %538 = vmatprep.mubr.f32.mxu0 0.0
    %539 = vmatmul.mubr.f32.gmra.mrb[0].mxu0 %v469
    %v540 = vpop.f32.mrb[0].mxu0
    %v541 = vadd.f32 0.0, %v540
    %v542 = vpop.f32.mrb[0].mxu0
    %543 = vdwg.mxu0
    %544 = vst.msk [vmem:[#allocation16] sm:$0xff] %vm467, %v541
    // Predicated region
    $region66: #{tpu_custom_call.1} parent=1 // pred_check
      _
    $region67: #{tpu_custom_call.1} parent=1 // pred_check_branch
      %546 = sbr.rel (0) target = $region69
    $region68: #{tpu_custom_call.1} parent=1 // pred_region
      %s548 = ssub.s32 128, 128
      %549 = vsyncadd [#allocation4], %s548
      %s551 = sshll.u32 [#allocation16], 4
      %s552 = int_to_ptr.vmem [resolvable:$true] %s551
      %554 = dma.vmem_to_hbm [thread:$0]  %s552, 128, %s8, [#allocation4]
    $region69: #{tpu_custom_call.1} parent=1 // pred_fallthru
      _
    // Predicated region
    $region70: #{tpu_custom_call.1} parent=1 // pred_check
      _
    $region71: #{tpu_custom_call.1} parent=1 // pred_check_branch
      %556 = sbr.rel (0) target = $region73
    $region72: #{tpu_custom_call.1} parent=1 // pred_region
      %557 = dma.done [#allocation4], 128
    $region73: #{tpu_custom_call.1} parent=1 // pred_fallthru
      _
    %558 = vsyncpa [#allocation3], 1
    %559 = vsyncpa [#allocation6], 1
    %560 = vsyncpa [#allocation9], 1
    %561 = vsyncpa [#allocation12], 1
    %562 = vsyncpa [#allocation15], 1
    %563 = vsyncpa [#allocation4], 1

</llo_original>
